<compile_context>
chip_gen: v6e
topology: v6e:2x2x1
jax: 0.10.0
libtpu: 0.0.40
codegen_flags: <defaults>
</compile_context>

<pallas_src>
import math

import jax
import jax.numpy as jnp
from jax import lax
from jax.experimental import pallas as pl
from jax.experimental.pallas import tpu as pltpu


def _sdpa_kernel(q_ref, kp_ref, vp_ref, wq_ref, bq_ref,
                 o_ref,
                 qp_sc, m_sc, l_sc, acc_sc):
    ki = pl.program_id(2)

    @pl.when(ki == 0)
    def _init():
        # Fused query projection, once per (bh, q_tile).  Scale is already
        # folded into wq/bq.  bf16 operands -> MXU, f32 accumulate.
        qp = lax.dot_general(q_ref[0].astype(jnp.bfloat16), wq_ref[...],
                             (((1,), (1,)), ((), ())),      # x @ W^T
                             preferred_element_type=jnp.float32)
        qp_sc[...] = (qp + bq_ref[...]).astype(jnp.bfloat16)
        m_sc[...] = jnp.full(m_sc.shape, -jnp.inf, dtype=jnp.float32)
        l_sc[...] = jnp.zeros(l_sc.shape, dtype=jnp.float32)
        acc_sc[...] = jnp.zeros(acc_sc.shape, dtype=jnp.float32)

    kp = kp_ref[0]                                   # (tk, Dp) bf16
    vp = vp_ref[0]                                   # (tk, Dp) bf16

    # Scores: (tq, tk) = q_proj @ k_proj^T, bf16 on the MXU, f32 accumulation.
    s = lax.dot_general(qp_sc[...], kp, (((1,), (1,)), ((), ())),
                        preferred_element_type=jnp.float32)

    # Online softmax update (f32 statistics).
    m_new = jnp.maximum(m_sc[...], s.max(axis=-1, keepdims=True))
    alpha = jnp.exp(m_sc[...] - m_new)
    p = jnp.exp(s - m_new)
    l_sc[...] = alpha * l_sc[...] + p.sum(axis=-1, keepdims=True)
    acc_sc[...] = alpha * acc_sc[...] + jnp.dot(
        p.astype(jnp.bfloat16), vp, preferred_element_type=jnp.float32)
    m_sc[...] = m_new

    @pl.when(ki == pl.num_programs(2) - 1)
    def _finalize():
        inv_l = pl.reciprocal(l_sc[...], approx=True)    # EUP, ~free
        o_ref[0] = (acc_sc[...] * inv_l).astype(o_ref.dtype)


def scaled_dot_product_attention(q, k, v, wq, bq, wk, bk, wv, bv,
                                 *, tq=None, tk=None):
    """q, k, v: (B, Hn, S, D); wX: (D, D) (PyTorch Linear weight); bX: (D,)."""
    B, Hn, S, D = q.shape
    scale = 1.0 / math.sqrt(D)

    # Pad head dim to a lane-dense multiple of 128 (padded features are zero
    # and are sliced off at the end).
    Dp = max(128, ((D + 127) // 128) * 128)

    # Larger q tile amortizes K/V re-reads; moderate KV tile bounds the (tq,tk)
    # f32 score/prob intermediates.
    if tq is None:
        tq = S if S <= 1024 else 1024
    if tk is None:
        tk = S if S <= 512 else 512
    assert S % tq == 0 and S % tk == 0, "seq len must be divisible by tiles"

    BH = B * Hn
    q3 = q.reshape(BH, S, D)
    k3 = k.reshape(BH, S, D)
    v3 = v.reshape(BH, S, D)

    # Fold the 1/sqrt(D) softmax scale into the query projection; zero-pad the
    # projection output dim to Dp.
    wq_p = (jnp.pad(wq, ((0, Dp - D), (0, 0))) * scale).astype(jnp.bfloat16)
    bq_p = (jnp.pad(bq, (0, Dp - D)) * scale).reshape(1, Dp)       # f32

    # Hoist the K/V projections: done exactly once (plain XLA matmuls, f32),
    # stored bf16 + lane-padded so the kernel streams MXU-ready tiles.
    kp = (jnp.einsum("bsd,ed->bse", k3, wk) + bk).astype(jnp.bfloat16)
    vp = (jnp.einsum("bsd,ed->bse", v3, wv) + bv).astype(jnp.bfloat16)
    kp = jnp.pad(kp, ((0, 0), (0, 0), (0, Dp - D)))
    vp = jnp.pad(vp, ((0, 0), (0, 0), (0, Dp - D)))

    grid = (BH, S // tq, S // tk)

    # Rough per-step VMEM working set (double-buffered blocks + scratch);
    # raise the scoped-VMEM cap accordingly (v5e default is only 16 MiB),
    # but never above v7x's 64 MiB physical budget.
    isz = q.dtype.itemsize
    est = (2 * tq * D * isz                 # q blocks
           + 2 * 2 * tk * Dp * 2            # kp + vp blocks (bf16)
           + 2 * tq * Dp * isz              # out blocks
           + tq * Dp * 2 + tq * Dp * 4      # qp_sc (bf16) + acc_sc (f32)
           + 2 * (Dp * D * 2 + Dp * 4))     # wq/bq blocks
    vmem_limit = int(min(max(2 * est, 32 * 1024 * 1024), 64 * 1024 * 1024))

    out = pl.pallas_call(
        _sdpa_kernel,
        out_shape=jax.ShapeDtypeStruct((BH, S, Dp), q.dtype),
        grid_spec=pltpu.PrefetchScalarGridSpec(
            num_scalar_prefetch=0,
            grid=grid,
            in_specs=[
                pl.BlockSpec((1, tq, D), lambda bh, qi, ki: (bh, qi, 0)),   # q
                pl.BlockSpec((1, tk, Dp), lambda bh, qi, ki: (bh, ki, 0)),  # k_proj
                pl.BlockSpec((1, tk, Dp), lambda bh, qi, ki: (bh, ki, 0)),  # v_proj
                pl.BlockSpec((Dp, D), lambda bh, qi, ki: (0, 0)),           # wQ (scaled, padded)
                pl.BlockSpec((1, Dp), lambda bh, qi, ki: (0, 0)),           # bQ (scaled, padded)
            ],
            out_specs=pl.BlockSpec((1, tq, Dp), lambda bh, qi, ki: (bh, qi, 0)),
            scratch_shapes=[
                pltpu.VMEM((tq, Dp), jnp.bfloat16),   # cached projected q tile
                pltpu.VMEM((tq, 1), jnp.float32),     # running max m
                pltpu.VMEM((tq, 1), jnp.float32),     # running denom l
                pltpu.VMEM((tq, Dp), jnp.float32),    # output accumulator
            ],
        ),
        compiler_params=pltpu.CompilerParams(
            dimension_semantics=("parallel", "parallel", "arbitrary"),
            vmem_limit_bytes=vmem_limit),
    )(q3, kp, vp, wq_p, bq_p)

    return out[..., :D].reshape(B, Hn, S, D)


def _reference(q, k, v, wq, bq, wk, bk, wv, bv):
    D = q.shape[-1]
    qp = jnp.einsum("bhsd,ed->bhse", q, wq) + bq
    kp = jnp.einsum("bhsd,ed->bhse", k, wk) + bk
    vp = jnp.einsum("bhsd,ed->bhse", v, wv) + bv
    s = jnp.einsum("bhqd,bhkd->bhqk", qp, kp) / jnp.sqrt(jnp.float32(D))
    p = jax.nn.softmax(s, axis=-1)
    return jnp.einsum("bhqk,bhkd->bhqd", p, vp)


if __name__ == "__main__":
    B, Hn, S, D = 2, 2, 8, 32  # batch, heads, seq, h_dim
    key = jax.random.PRNGKey(0)
    ks = jax.random.split(key, 9)

    q = jax.random.normal(ks[0], (B, Hn, S, D), dtype=jnp.float32)
    k = jax.random.normal(ks[1], (B, Hn, S, D), dtype=jnp.float32)
    v = jax.random.normal(ks[2], (B, Hn, S, D), dtype=jnp.float32)

    lim = 1.0 / math.sqrt(D)  # PyTorch nn.Linear default init range
    wq = jax.random.uniform(ks[3], (D, D), jnp.float32, -lim, lim)
    bq = jax.random.uniform(ks[4], (D,), jnp.float32, -lim, lim)
    wk = jax.random.uniform(ks[5], (D, D), jnp.float32, -lim, lim)
    bk = jax.random.uniform(ks[6], (D,), jnp.float32, -lim, lim)
    wv = jax.random.uniform(ks[7], (D, D), jnp.float32, -lim, lim)
    bv = jax.random.uniform(ks[8], (D,), jnp.float32, -lim, lim)

    out = scaled_dot_product_attention(q, k, v, wq, bq, wk, bk, wv, bv)
    out = jax.block_until_ready(out)

    ref = _reference(q, k, v, wq, bq, wk, bk, wv, bv)
    assert out.shape == (B, Hn, S, D)
    max_err = float(jnp.max(jnp.abs(out - ref)))
    # bf16 MXU path (standard flash-attention tradeoff) -> slightly looser tol.
    assert jnp.allclose(out, ref, atol=2e-2, rtol=2e-2), f"max err {max_err}"
    print("KERNEL_OK")
</pallas_src>

<mosaic_0001>
module attributes {stable_mosaic.version = 11 : i64} {
  func.func @_sdpa_kernel(%arg0: i32, %arg1: i32, %arg2: i32, %arg3: memref<1x8x32xf32, #tpu.memory_space<vmem>>, %arg4: memref<1x8x128xbf16, #tpu.memory_space<vmem>>, %arg5: memref<1x8x128xbf16, #tpu.memory_space<vmem>>, %arg6: memref<128x32xbf16, #tpu.memory_space<vmem>>, %arg7: memref<1x128xf32, #tpu.memory_space<vmem>>, %arg8: memref<1x8x128xf32, #tpu.memory_space<vmem>>, %arg9: memref<8x128xbf16, #tpu.memory_space<vmem>>, %arg10: memref<8x1xf32, #tpu.memory_space<vmem>>, %arg11: memref<8x1xf32, #tpu.memory_space<vmem>>, %arg12: memref<8x128xf32, #tpu.memory_space<vmem>>) attributes {dimension_semantics = [#tpu.dimension_semantics<parallel>, #tpu.dimension_semantics<parallel>, #tpu.dimension_semantics<arbitrary>], iteration_bounds = array<i64: 4, 1, 1>, scalar_prefetch = 0 : i64, scratch_operands = 4 : i64, tpu.core_type = #tpu.core_type<tc>, window_params = [{transform_indices = @transform_0, window_bounds = array<i64: 1, 8, 32>}, {transform_indices = @transform_1, window_bounds = array<i64: 1, 8, 128>}, {transform_indices = @transform_2, window_bounds = array<i64: 1, 8, 128>}, {pipeline_mode = #tpu.pipeline_mode<synchronous>, transform_indices = @transform_3, window_bounds = array<i64: 128, 32>}, {pipeline_mode = #tpu.pipeline_mode<synchronous>, transform_indices = @transform_4, window_bounds = array<i64: 1, 128>}, {transform_indices = @transform_5, window_bounds = array<i64: 1, 8, 128>}]} {
    %c0_i32 = arith.constant 0 : i32
    %0 = arith.cmpi eq, %arg2, %c0_i32 : i32
    %1 = arith.extui %0 : i1 to i32
    %c0_i32_0 = arith.constant 0 : i32
    %2 = arith.cmpi ne, %1, %c0_i32_0 : i32
    scf.if %2 {
      %c0_27 = arith.constant 0 : index
      %c0_28 = arith.constant 0 : index
      %c0_29 = arith.constant 0 : index
      %36 = vector.load %arg3[%c0_27, %c0_28, %c0_29] : memref<1x8x32xf32, #tpu.memory_space<vmem>>, vector<1x8x32xf32>
      %37 = vector.shape_cast %36 : vector<1x8x32xf32> to vector<8x32xf32>
      %38 = arith.truncf %37 : vector<8x32xf32> to vector<8x32xbf16>
      %c0_30 = arith.constant 0 : index
      %c0_31 = arith.constant 0 : index
      %39 = vector.load %arg6[%c0_30, %c0_31] : memref<128x32xbf16, #tpu.memory_space<vmem>>, vector<128x32xbf16>
      %cst_32 = arith.constant dense<0.000000e+00> : vector<8x128xf32>
      %40 = tpu.matmul %38, %39, %cst_32 {dimension_numbers = #tpu.dot_dimension_numbers<[1], [1], [0], [0], [0, 0, 1, 0], [], []>} : vector<8x32xbf16>, vector<128x32xbf16>, vector<8x128xf32> -> vector<8x128xf32>
      %c0_33 = arith.constant 0 : index
      %c0_34 = arith.constant 0 : index
      %41 = vector.load %arg7[%c0_33, %c0_34] : memref<1x128xf32, #tpu.memory_space<vmem>>, vector<1x128xf32>
      %42 = vector.broadcast %41 : vector<1x128xf32> to vector<8x128xf32>
      %43 = arith.addf %40, %42 : vector<8x128xf32>
      %44 = arith.truncf %43 : vector<8x128xf32> to vector<8x128xbf16>
      %c0_35 = arith.constant 0 : index
      %c0_36 = arith.constant 0 : index
      %45 = vector.load %arg9[%c0_35, %c0_36] : memref<8x128xbf16, #tpu.memory_space<vmem>>, vector<8x128xbf16>
      tpu.vector_store %arg9[%c0_35, %c0_36], %44 {strides = array<i32>} : memref<8x128xbf16, #tpu.memory_space<vmem>>, vector<8x128xbf16>,
      %cst_37 = arith.constant 0xFF800000 : f32
      %46 = vector.broadcast %cst_37 : f32 to vector<8x1xf32>
      %c0_38 = arith.constant 0 : index
      %c0_39 = arith.constant 0 : index
      %47 = vector.load %arg10[%c0_38, %c0_39] : memref<8x1xf32, #tpu.memory_space<vmem>>, vector<8x1xf32>
      tpu.vector_store %arg10[%c0_38, %c0_39], %46 {strides = array<i32>} : memref<8x1xf32, #tpu.memory_space<vmem>>, vector<8x1xf32>,
      %cst_40 = arith.constant 0.000000e+00 : f32
      %48 = vector.broadcast %cst_40 : f32 to vector<8x1xf32>
      %c0_41 = arith.constant 0 : index
      %c0_42 = arith.constant 0 : index
      %49 = vector.load %arg11[%c0_41, %c0_42] : memref<8x1xf32, #tpu.memory_space<vmem>>, vector<8x1xf32>
      tpu.vector_store %arg11[%c0_41, %c0_42], %48 {strides = array<i32>} : memref<8x1xf32, #tpu.memory_space<vmem>>, vector<8x1xf32>,
      %cst_43 = arith.constant 0.000000e+00 : f32
      %50 = vector.broadcast %cst_43 : f32 to vector<8x128xf32>
      %c0_44 = arith.constant 0 : index
      %c0_45 = arith.constant 0 : index
      %51 = vector.load %arg12[%c0_44, %c0_45] : memref<8x128xf32, #tpu.memory_space<vmem>>, vector<8x128xf32>
      tpu.vector_store %arg12[%c0_44, %c0_45], %50 {strides = array<i32>} : memref<8x128xf32, #tpu.memory_space<vmem>>, vector<8x128xf32>,
    } else {
    }
    %c0 = arith.constant 0 : index
    %c0_1 = arith.constant 0 : index
    %c0_2 = arith.constant 0 : index
    %3 = vector.load %arg4[%c0, %c0_1, %c0_2] : memref<1x8x128xbf16, #tpu.memory_space<vmem>>, vector<1x8x128xbf16>
    %4 = vector.shape_cast %3 : vector<1x8x128xbf16> to vector<8x128xbf16>
    %c0_3 = arith.constant 0 : index
    %c0_4 = arith.constant 0 : index
    %c0_5 = arith.constant 0 : index
    %5 = vector.load %arg5[%c0_3, %c0_4, %c0_5] : memref<1x8x128xbf16, #tpu.memory_space<vmem>>, vector<1x8x128xbf16>
    %6 = vector.shape_cast %5 : vector<1x8x128xbf16> to vector<8x128xbf16>
    %c0_6 = arith.constant 0 : index
    %c0_7 = arith.constant 0 : index
    %7 = vector.load %arg9[%c0_6, %c0_7] : memref<8x128xbf16, #tpu.memory_space<vmem>>, vector<8x128xbf16>
    %cst = arith.constant dense<0.000000e+00> : vector<8x8xf32>
    %8 = tpu.matmul %7, %4, %cst {dimension_numbers = #tpu.dot_dimension_numbers<[1], [1], [0], [0], [0, 0, 1, 0], [], []>} : vector<8x128xbf16>, vector<8x128xbf16>, vector<8x8xf32> -> vector<8x8xf32>
    %c0_8 = arith.constant 0 : index
    %c0_9 = arith.constant 0 : index
    %9 = vector.load %arg10[%c0_8, %c0_9] : memref<8x1xf32, #tpu.memory_space<vmem>>, vector<8x1xf32>
    %cst_10 = arith.constant dense<0xFF800000> : vector<8xf32>
    %10 = vector.multi_reduction <maximumf>, %8, %cst_10 [1] : vector<8x8xf32> to vector<8xf32>
    %11 = vector.shape_cast %10 : vector<8xf32> to vector<8x1xf32>
    %12 = arith.maximumf %9, %11 : vector<8x1xf32>
    %c0_11 = arith.constant 0 : index
    %c0_12 = arith.constant 0 : index
    %13 = vector.load %arg10[%c0_11, %c0_12] : memref<8x1xf32, #tpu.memory_space<vmem>>, vector<8x1xf32>
    %14 = arith.subf %13, %12 : vector<8x1xf32>
    %15 = math.exp %14 : vector<8x1xf32>
    %16 = vector.broadcast %12 : vector<8x1xf32> to vector<8x8xf32>
    %17 = arith.subf %8, %16 : vector<8x8xf32>
    %18 = math.exp %17 : vector<8x8xf32>
    %c0_13 = arith.constant 0 : index
    %c0_14 = arith.constant 0 : index
    %19 = vector.load %arg11[%c0_13, %c0_14] : memref<8x1xf32, #tpu.memory_space<vmem>>, vector<8x1xf32>
    %20 = arith.mulf %15, %19 : vector<8x1xf32>
    %cst_15 = arith.constant dense<0.000000e+00> : vector<8xf32>
    %21 = vector.multi_reduction <add>, %18, %cst_15 [1] : vector<8x8xf32> to vector<8xf32>
    %22 = vector.shape_cast %21 : vector<8xf32> to vector<8x1xf32>
    %23 = arith.addf %20, %22 : vector<8x1xf32>
    %c0_16 = arith.constant 0 : index
    %c0_17 = arith.constant 0 : index
    %24 = vector.load %arg11[%c0_16, %c0_17] : memref<8x1xf32, #tpu.memory_space<vmem>>, vector<8x1xf32>
    tpu.vector_store %arg11[%c0_16, %c0_17], %23 {strides = array<i32>} : memref<8x1xf32, #tpu.memory_space<vmem>>, vector<8x1xf32>,
    %c0_18 = arith.constant 0 : index
    %c0_19 = arith.constant 0 : index
    %25 = vector.load %arg12[%c0_18, %c0_19] : memref<8x128xf32, #tpu.memory_space<vmem>>, vector<8x128xf32>
    %26 = vector.broadcast %15 : vector<8x1xf32> to vector<8x128xf32>
    %27 = arith.mulf %26, %25 : vector<8x128xf32>
    %28 = arith.truncf %18 : vector<8x8xf32> to vector<8x8xbf16>
    %cst_20 = arith.constant dense<0.000000e+00> : vector<8x128xf32>
    %29 = tpu.matmul %28, %6, %cst_20 {dimension_numbers = #tpu.dot_dimension_numbers<[1], [0], [0], [1], [0, 0, 1, 1], [], []>} : vector<8x8xbf16>, vector<8x128xbf16>, vector<8x128xf32> -> vector<8x128xf32>
    %30 = arith.addf %27, %29 : vector<8x128xf32>
    %c0_21 = arith.constant 0 : index
    %c0_22 = arith.constant 0 : index
    %31 = vector.load %arg12[%c0_21, %c0_22] : memref<8x128xf32, #tpu.memory_space<vmem>>, vector<8x128xf32>
    tpu.vector_store %arg12[%c0_21, %c0_22], %30 {strides = array<i32>} : memref<8x128xf32, #tpu.memory_space<vmem>>, vector<8x128xf32>,
    %c0_23 = arith.constant 0 : index
    %c0_24 = arith.constant 0 : index
    %32 = vector.load %arg10[%c0_23, %c0_24] : memref<8x1xf32, #tpu.memory_space<vmem>>, vector<8x1xf32>
    tpu.vector_store %arg10[%c0_23, %c0_24], %12 {strides = array<i32>} : memref<8x1xf32, #tpu.memory_space<vmem>>, vector<8x1xf32>,
    %c0_i32_25 = arith.constant 0 : i32
    %33 = arith.cmpi eq, %arg2, %c0_i32_25 : i32
    %34 = arith.extui %33 : i1 to i32
    %c0_i32_26 = arith.constant 0 : i32
    %35 = arith.cmpi ne, %34, %c0_i32_26 : i32
    scf.if %35 {
      %c0_27 = arith.constant 0 : index
      %c0_28 = arith.constant 0 : index
      %36 = vector.load %arg11[%c0_27, %c0_28] : memref<8x1xf32, #tpu.memory_space<vmem>>, vector<8x1xf32>
      %37 = tpu.reciprocal %36 {approx = true} : vector<8x1xf32> -> vector<8x1xf32>
      %c0_29 = arith.constant 0 : index
      %c0_30 = arith.constant 0 : index
      %38 = vector.load %arg12[%c0_29, %c0_30] : memref<8x128xf32, #tpu.memory_space<vmem>>, vector<8x128xf32>
      %39 = vector.broadcast %37 : vector<8x1xf32> to vector<8x128xf32>
      %40 = arith.mulf %38, %39 : vector<8x128xf32>
      %c0_31 = arith.constant 0 : index
      %c0_32 = arith.constant 0 : index
      %c0_33 = arith.constant 0 : index
      %41 = vector.load %arg8[%c0_31, %c0_32, %c0_33] : memref<1x8x128xf32, #tpu.memory_space<vmem>>, vector<1x8x128xf32>
      %42 = vector.shape_cast %41 : vector<1x8x128xf32> to vector<8x128xf32>
      %43 = vector.shape_cast %40 : vector<8x128xf32> to vector<1x8x128xf32>
      tpu.vector_store %arg8[%c0_31, %c0_32, %c0_33], %43 {strides = array<i32>} : memref<1x8x128xf32, #tpu.memory_space<vmem>>, vector<1x8x128xf32>,
    } else {
    }
    return
  }
  func.func @transform_0(%arg0: i32, %arg1: i32, %arg2: i32) -> (i32, i32, i32) {
    %c0_i32 = arith.constant 0 : i32
    %c0_i32_0 = arith.constant 0 : i32
    return %arg0, %arg1, %c0_i32 : i32, i32, i32
  }
  func.func @transform_1(%arg0: i32, %arg1: i32, %arg2: i32) -> (i32, i32, i32) {
    %c0_i32 = arith.constant 0 : i32
    %c0_i32_0 = arith.constant 0 : i32
    return %arg0, %arg2, %c0_i32 : i32, i32, i32
  }
  func.func @transform_2(%arg0: i32, %arg1: i32, %arg2: i32) -> (i32, i32, i32) {
    %c0_i32 = arith.constant 0 : i32
    %c0_i32_0 = arith.constant 0 : i32
    return %arg0, %arg2, %c0_i32 : i32, i32, i32
  }
  func.func @transform_3(%arg0: i32, %arg1: i32, %arg2: i32) -> (i32, i32) {
    %c0_i32 = arith.constant 0 : i32
    %c0_i32_0 = arith.constant 0 : i32
    %c0_i32_1 = arith.constant 0 : i32
    return %c0_i32, %c0_i32_0 : i32, i32
  }
  func.func @transform_4(%arg0: i32, %arg1: i32, %arg2: i32) -> (i32, i32) {
    %c0_i32 = arith.constant 0 : i32
    %c0_i32_0 = arith.constant 0 : i32
    %c0_i32_1 = arith.constant 0 : i32
    return %c0_i32, %c0_i32_0 : i32, i32
  }
  func.func @transform_5(%arg0: i32, %arg1: i32, %arg2: i32) -> (i32, i32, i32) {
    %c0_i32 = arith.constant 0 : i32
    %c0_i32_0 = arith.constant 0 : i32
    return %arg0, %arg1, %c0_i32 : i32, i32, i32
  }
}

</mosaic_0001>

<llo_original>
// kernel: tpu_custom_call.1
$region0: #{tpu_custom_call.1}
  #allocation0 [shape = 'u32[]', space=smem, size = 0x4, offset = 0x4, fixed_abs, tag = 'smem constant byte address 0x4 - core index']
  #allocation1 [shape = 'u32[144,128]{1,0:T(1,128)}', space=vmem, size = 0x12000, scoped, tag = 'internal scratch']
  #allocation2 [shape = 'bf16[8,128]{1,0:T(8,128)(2,1)}', space=vmem, size = 0x800, scoped, tag = 'scratch operand']
  #allocation3 [shape = 'f32[8,1]{1,0:T(8,128)}', space=vmem, size = 0x1000, scoped, tag = 'scratch operand']
  #allocation4 [shape = 'f32[8,1]{1,0:T(8,128)}', space=vmem, size = 0x1000, scoped, tag = 'scratch operand']
  #allocation5 [shape = 'f32[8,128]{1,0:T(8,128)}', space=vmem, size = 0x1000, scoped, tag = 'scratch operand']
  %s0 = inlined_call_operand.vmem [shape: f32[4,8,32], index: 0, kind: input, shape index: {}]
  %s1 = inlined_call_operand.vmem [shape: bf16[4,8,128], index: 1, kind: input, shape index: {}]
  %s2 = inlined_call_operand.vmem [shape: bf16[4,8,128], index: 2, kind: input, shape index: {}]
  %s3 = inlined_call_operand.vmem [shape: bf16[128,32], index: 3, kind: input, shape index: {}]
  %s4 = inlined_call_operand.vmem [shape: f32[1,128], index: 4, kind: input, shape index: {}]
  %s5 = inlined_call_operand.hbm [shape: f32[4,8,128], index: 5, kind: output, shape index: {}]
  %s6 = sld [smem:[#allocation0]]
  $region61: #{tpu_custom_call.1} parent=0
    _
  %s8 = ssub.s32 1, %s6
  %s9 = scalar_select 0, %s8, %s6
  $region1: #{tpu_custom_call.1} parent=0
    #allocation6 [shape = 'u8[8192]{0}', space=vmem, size = 0x2000, scoped, tag = 'output window, operand 0']
    #allocation7 [shape = 's32[2]{0}', space=sflag, size = 0x8, scoped, tag = 'scoped memory for tpu_custom_call.1']
    %10 = vsyncpa [#allocation7], 0
    %s11 = scalar_lea.sflag [#allocation7], 1
    %12 = vsyncpa %s11, 0
    loop: start=0, step=1, limit=6
    $region2: #{tpu_custom_call.1} parent=1 // loop_pre_header
      _
    $region3: #{tpu_custom_call.1} parent=1 // loop_header
      %s14 = sphi 0, %s18
      %p15 = scmp.ge.s32.totalorder %s14, 6
      %s21 = sphi 0, %s40
      %s22 = sphi 0, %s36
      %s23 = sphi 0, %s32
      %s24 = sphi 0, %s21
      %s25 = sphi 0, %s22
      %s26 = sphi 0, %s23
      %s27 = sphi 0, %s24
      %s28 = sphi 0, %s25
      %s29 = sphi 0, %s26
      %s45 = sphi 0, %s47
      %s48 = sphi 0, %s45
      %s49 = sphi 0, %s48
      %s65 = sphi 0, %s49
      %s73 = sphi 0, %s75
      %s76 = sphi 0, %s73
      %s77 = sphi 0, %s76
      %s93 = sphi 0, %s77
      %s101 = sphi 0, %s103
      %s104 = sphi 0, %s101
      %s105 = sphi 0, %s104
      %s121 = sphi 0, %s105
      %s125 = sphi 0, %s125
      %s127 = sphi 0, %s125
      %s128 = sphi 0, %s127
      %s142 = sphi 0, %s128
      %s146 = sphi 0, %s146
      %s148 = sphi 0, %s146
      %s149 = sphi 0, %s148
      %s163 = sphi 0, %s149
      %s171 = sphi 0, %s173
      %s174 = sphi 0, %s171
      %s175 = sphi 0, %s174
      %s191 = sphi 0, %s175
    $region4: #{tpu_custom_call.1} parent=1 // loop_header_branch
      %17 = sbr.rel (%p15) target = $region8
    $region5: #{tpu_custom_call.1} parent=1 // loop_body
      %s19 = ssub.s32 %s14, 1
      %s20 = ssub.s32 %s14, 2
      %s30 = sadd.s32 1, %s23
      %p31 = scmp.ge.s32.totalorder %s30, 1
      %s32 = scalar_select %p31, 0, %s30
      %s33 = sadd.s32 1, %s22
      %s34 = scalar_select %p31, %s33, %s22
      %p35 = scmp.ge.s32.totalorder %s34, 1
      %s36 = scalar_select %p35, 0, %s34
      %s37 = sadd.s32 1, %s21
      %s38 = scalar_select %p35, %s37, %s21
      %p39 = scmp.ge.s32.totalorder %s38, 4
      %s40 = scalar_select %p39, 0, %s38
      %s41 = ssub.s32 %s21, %s40
      %s42 = ssub.s32 %s22, %s36
      %s43 = sor.u32 %s41, %s42
      %p44 = scmp.eq.s32.totalorder %s43, 0
      %s46 = sadd.s32 %s45, 1
      %s47 = scalar_select %p44, %s45, %s46
      %p50 = pneg %p44
      %p51 = scmp.eq.s32.totalorder %s14, 3
      %p52 = por %p50, %p51
      %p53 = scmp.ne.s32.totalorder %s45, %s48
      %p54 = scmp.eq.s32.totalorder %s14, 0
      %p55 = por %p53, %p54
      %p56 = scmp.ne.s32.totalorder %s45, %s48
      %p57 = scmp.eq.s32.totalorder %s19, 3
      %p58 = por %p56, %p57
      %p59 = scmp.ne.s32.totalorder %s48, %s49
      %p60 = scmp.eq.s32.totalorder %s19, 0
      %p61 = por %p59, %p60
      %p62 = scmp.ne.s32.totalorder %s48, %s49
      %p63 = scmp.eq.s32.totalorder %s20, 3
      %p64 = por %p62, %p63
      %p66 = scmp.ne.s32.totalorder %s49, %s65
      %p67 = scmp.eq.s32.totalorder %s20, 0
      %p68 = por %p66, %p67
      %s69 = ssub.s32 %s21, %s40
      %s70 = ssub.s32 %s23, %s32
      %s71 = sor.u32 %s69, %s70
      %p72 = scmp.eq.s32.totalorder %s71, 0
      %s74 = sadd.s32 %s73, 1
      %s75 = scalar_select %p72, %s73, %s74
      %p78 = pneg %p72
      %p79 = scmp.eq.s32.totalorder %s14, 3
      %p80 = por %p78, %p79
      %p81 = scmp.ne.s32.totalorder %s73, %s76
      %p82 = scmp.eq.s32.totalorder %s14, 0
      %p83 = por %p81, %p82
      %p84 = scmp.ne.s32.totalorder %s73, %s76
      %p85 = scmp.eq.s32.totalorder %s19, 3
      %p86 = por %p84, %p85
      %p87 = scmp.ne.s32.totalorder %s76, %s77
      %p88 = scmp.eq.s32.totalorder %s19, 0
      %p89 = por %p87, %p88
      %p90 = scmp.ne.s32.totalorder %s76, %s77
      %p91 = scmp.eq.s32.totalorder %s20, 3
      %p92 = por %p90, %p91
      %p94 = scmp.ne.s32.totalorder %s77, %s93
      %p95 = scmp.eq.s32.totalorder %s20, 0
      %p96 = por %p94, %p95
      %s97 = ssub.s32 %s21, %s40
      %s98 = ssub.s32 %s23, %s32
      %s99 = sor.u32 %s97, %s98
      %p100 = scmp.eq.s32.totalorder %s99, 0
      %s102 = sadd.s32 %s101, 1
      %s103 = scalar_select %p100, %s101, %s102
      %p106 = pneg %p100
      %p107 = scmp.eq.s32.totalorder %s14, 3
      %p108 = por %p106, %p107
      %p109 = scmp.ne.s32.totalorder %s101, %s104
      %p110 = scmp.eq.s32.totalorder %s14, 0
      %p111 = por %p109, %p110
      %p112 = scmp.ne.s32.totalorder %s101, %s104
      %p113 = scmp.eq.s32.totalorder %s19, 3
      %p114 = por %p112, %p113
      %p115 = scmp.ne.s32.totalorder %s104, %s105
      %p116 = scmp.eq.s32.totalorder %s19, 0
      %p117 = por %p115, %p116
      %p118 = scmp.ne.s32.totalorder %s104, %s105
      %p119 = scmp.eq.s32.totalorder %s20, 3
      %p120 = por %p118, %p119
      %p122 = scmp.ne.s32.totalorder %s105, %s121
      %p123 = scmp.eq.s32.totalorder %s20, 0
      %p124 = por %p122, %p123
      %s126 = sadd.s32 %s125, 1
      %p129 = scmp.eq.s32.totalorder %s14, 3
      %p130 = scmp.ne.s32.totalorder %s125, %s127
      %p131 = scmp.eq.s32.totalorder %s14, 0
      %p132 = por %p130, %p131
      %p133 = scmp.ne.s32.totalorder %s125, %s127
      %p134 = scmp.eq.s32.totalorder %s19, 3
      %p135 = por %p133, %p134
      %p136 = scmp.ne.s32.totalorder %s127, %s128
      %p137 = scmp.eq.s32.totalorder %s19, 0
      %p138 = por %p136, %p137
      %p139 = scmp.ne.s32.totalorder %s127, %s128
      %p140 = scmp.eq.s32.totalorder %s20, 3
      %p141 = por %p139, %p140
      %p143 = scmp.ne.s32.totalorder %s128, %s142
      %p144 = scmp.eq.s32.totalorder %s20, 0
      %p145 = por %p143, %p144
      %s147 = sadd.s32 %s146, 1
      %p150 = scmp.eq.s32.totalorder %s14, 3
      %p151 = scmp.ne.s32.totalorder %s146, %s148
      %p152 = scmp.eq.s32.totalorder %s14, 0
      %p153 = por %p151, %p152
      %p154 = scmp.ne.s32.totalorder %s146, %s148
      %p155 = scmp.eq.s32.totalorder %s19, 3
      %p156 = por %p154, %p155
      %p157 = scmp.ne.s32.totalorder %s148, %s149
      %p158 = scmp.eq.s32.totalorder %s19, 0
      %p159 = por %p157, %p158
      %p160 = scmp.ne.s32.totalorder %s148, %s149
      %p161 = scmp.eq.s32.totalorder %s20, 3
      %p162 = por %p160, %p161
      %p164 = scmp.ne.s32.totalorder %s149, %s163
      %p165 = scmp.eq.s32.totalorder %s20, 0
      %p166 = por %p164, %p165
      %s167 = ssub.s32 %s21, %s40
      %s168 = ssub.s32 %s22, %s36
      %s169 = sor.u32 %s167, %s168
      %p170 = scmp.eq.s32.totalorder %s169, 0
      %s172 = sadd.s32 %s171, 1
      %s173 = scalar_select %p170, %s171, %s172
      %p176 = pneg %p170
      %p177 = scmp.eq.s32.totalorder %s14, 3
      %p178 = por %p176, %p177
      %p179 = scmp.ne.s32.totalorder %s171, %s174
      %p180 = scmp.eq.s32.totalorder %s14, 0
      %p181 = por %p179, %p180
      %p182 = scmp.ne.s32.totalorder %s171, %s174
      %p183 = scmp.eq.s32.totalorder %s19, 3
      %p184 = por %p182, %p183
      %p185 = scmp.ne.s32.totalorder %s174, %s175
      %p186 = scmp.eq.s32.totalorder %s19, 0
      %p187 = por %p185, %p186
      %p188 = scmp.ne.s32.totalorder %s174, %s175
      %p189 = scmp.eq.s32.totalorder %s20, 3
      %p190 = por %p188, %p189
      %p192 = scmp.ne.s32.totalorder %s175, %s191
      %p193 = scmp.eq.s32.totalorder %s20, 0
      %p194 = por %p192, %p193
      %p195 = scmp.le.s32.totalorder 1, %s14
      %p196 = scmp.lt.s32.totalorder %s14, 5
      %p197 = pnand %p195, %p196
      %p198 = pneg %p197
      // Predicated region
      $region9: #{tpu_custom_call.1} parent=5 // pred_check
        _
      $region10: #{tpu_custom_call.1} parent=5 // pred_check_branch
        %200 = sbr.rel (%p197) target = $region12
      $region11: #{tpu_custom_call.1} parent=5 // pred_region
        %s201 = ssub.s32 %s14, 1
        // Predicated region
        $region13: #{tpu_custom_call.1} parent=11 // pred_check
          %p202 = pneg %p138
        $region14: #{tpu_custom_call.1} parent=11 // pred_check_branch
          %204 = sbr.rel (%p202) target = $region16
        $region15: #{tpu_custom_call.1} parent=11 // pred_region
          _
        $region16: #{tpu_custom_call.1} parent=11 // pred_fallthru
          _
        // Predicated region
        $region17: #{tpu_custom_call.1} parent=11 // pred_check
          %p205 = pneg %p159
        $region18: #{tpu_custom_call.1} parent=11 // pred_check_branch
          %207 = sbr.rel (%p205) target = $region20
        $region19: #{tpu_custom_call.1} parent=11 // pred_region
          _
        $region20: #{tpu_custom_call.1} parent=11 // pred_fallthru
          _
      $region12: #{tpu_custom_call.1} parent=5 // pred_fallthru
        _
      %p208 = scmp.lt.s32.totalorder %s14, 4
      // Predicated region
      $region21: #{tpu_custom_call.1} parent=5 // pred_check
        %p209 = pneg %p208
      $region22: #{tpu_custom_call.1} parent=5 // pred_check_branch
        %211 = sbr.rel (%p209) target = $region24
      $region23: #{tpu_custom_call.1} parent=5 // pred_region
        // Predicated region
        $region25: #{tpu_custom_call.1} parent=23 // pred_check
          %p212 = pneg %p55
        $region26: #{tpu_custom_call.1} parent=23 // pred_check_branch
          %214 = sbr.rel (%p212) target = $region28
        $region27: #{tpu_custom_call.1} parent=23 // pred_region
          %p215 = scmp.lt.s32.totalorder %s21, 3
          %s216 = scalar_select %p215, %s21, 3
          %p217 = scmp.lt.s32.totalorder %s22, 0
          %s218 = scalar_select %p217, %s22, 0
          %s219 = sadd.s32 %s218, %s216
          %s220 = smul.addr %s219, 8
          %s221 = scalar_lea.vmem %s0, %s220
        $region28: #{tpu_custom_call.1} parent=23 // pred_fallthru
          _
        // Predicated region
        $region29: #{tpu_custom_call.1} parent=23 // pred_check
          %p222 = pneg %p83
        $region30: #{tpu_custom_call.1} parent=23 // pred_check_branch
          %224 = sbr.rel (%p222) target = $region32
        $region31: #{tpu_custom_call.1} parent=23 // pred_region
          %p225 = scmp.lt.s32.totalorder %s21, 3
          %s226 = scalar_select %p225, %s21, 3
          %p227 = scmp.lt.s32.totalorder %s23, 0
          %s228 = scalar_select %p227, %s23, 0
          %s229 = sadd.s32 %s228, %s226
          %s230 = smul.addr %s229, 4
          %s231 = scalar_lea.vmem %s1, %s230
        $region32: #{tpu_custom_call.1} parent=23 // pred_fallthru
          _
        // Predicated region
        $region33: #{tpu_custom_call.1} parent=23 // pred_check
          %p232 = pneg %p111
        $region34: #{tpu_custom_call.1} parent=23 // pred_check_branch
          %234 = sbr.rel (%p232) target = $region36
        $region35: #{tpu_custom_call.1} parent=23 // pred_region
          %p235 = scmp.lt.s32.totalorder %s21, 3
          %s236 = scalar_select %p235, %s21, 3
          %p237 = scmp.lt.s32.totalorder %s23, 0
          %s238 = scalar_select %p237, %s23, 0
          %s239 = sadd.s32 %s238, %s236
          %s240 = smul.addr %s239, 4
          %s241 = scalar_lea.vmem %s2, %s240
        $region36: #{tpu_custom_call.1} parent=23 // pred_fallthru
          _
      $region24: #{tpu_custom_call.1} parent=5 // pred_fallthru
        _
      %p242 = scmp.le.s32.totalorder 1, %s14
      %p243 = scmp.lt.s32.totalorder %s14, 5
      %p244 = pnand %p242, %p243
      %p245 = pneg %p244
      // Predicated region
      $region37: #{tpu_custom_call.1} parent=5 // pred_check
        _
      $region38: #{tpu_custom_call.1} parent=5 // pred_check_branch
        %247 = sbr.rel (%p244) target = $region40
      $region39: #{tpu_custom_call.1} parent=5 // pred_region
        %s248 = ssub.s32 %s14, 1
        %p249 = scmp.lt.s32.totalorder %s24, 3
        %s250 = scalar_select %p249, %s24, 3
        %p251 = scmp.lt.s32.totalorder %s25, 0
        %s252 = scalar_select %p251, %s25, 0
        %s253 = sadd.s32 %s252, %s250
        %s254 = smul.addr %s253, 8
        %s255 = scalar_lea.vmem %s0, %s254
        %p256 = pneg %p61
        %p257 = pneg %p58
        %p258 = scmp.lt.s32.totalorder %s24, 3
        %s259 = scalar_select %p258, %s24, 3
        %p260 = scmp.lt.s32.totalorder %s26, 0
        %s261 = scalar_select %p260, %s26, 0
        %s262 = sadd.s32 %s261, %s259
        %s263 = smul.addr %s262, 4
        %s264 = scalar_lea.vmem %s1, %s263
        %p265 = pneg %p89
        %p266 = pneg %p86
        %p267 = scmp.lt.s32.totalorder %s24, 3
        %s268 = scalar_select %p267, %s24, 3
        %p269 = scmp.lt.s32.totalorder %s26, 0
        %s270 = scalar_select %p269, %s26, 0
        %s271 = sadd.s32 %s270, %s268
        %s272 = smul.addr %s271, 4
        %s273 = scalar_lea.vmem %s2, %s272
        %p274 = pneg %p117
        %p275 = pneg %p114
        %p276 = pneg %p138
        %p277 = pneg %p135
        %p278 = pneg %p159
        %p279 = pneg %p156
        %p280 = pneg %p187
        %p281 = pneg %p184
        %s282 = sand.u32 %s174, 1
        %s283 = scalar_lea.sflag [#allocation7], %s282
        %s284 = sand.u32 %s174, 1
        %s285 = smul.addr %s284, 8
        %s286 = scalar_lea.vmem [#allocation6], %s285
        %p287 = scmp.lt.s32.totalorder %s24, 3
        %s288 = scalar_select %p287, %s24, 3
        %p289 = scmp.lt.s32.totalorder %s25, 0
        %s290 = scalar_select %p289, %s25, 0
        %s291 = sadd.s32 %s290, %s288
        %s292 = smul.addr %s291, 8
        %s293 = scalar_lea.vmem %s0, %s292
        %p294 = scmp.lt.s32.totalorder %s24, 3
        %s295 = scalar_select %p294, %s24, 3
        %p296 = scmp.lt.s32.totalorder %s26, 0
        %s297 = scalar_select %p296, %s26, 0
        %s298 = sadd.s32 %s297, %s295
        %s299 = smul.addr %s298, 4
        %s300 = scalar_lea.vmem %s1, %s299
        %p301 = scmp.lt.s32.totalorder %s24, 3
        %s302 = scalar_select %p301, %s24, 3
        %p303 = scmp.lt.s32.totalorder %s26, 0
        %s304 = scalar_select %p303, %s26, 0
        %s305 = sadd.s32 %s304, %s302
        %s306 = smul.addr %s305, 4
        %s307 = scalar_lea.vmem %s2, %s306
        %p309 = scmp.eq.s32.totalorder %s26, 0
        // Predicated region
        $region41: #{tpu_custom_call.1} parent=39 // pred_check
          %p310 = pneg %p309
        $region42: #{tpu_custom_call.1} parent=39 // pred_check_branch
          %312 = sbr.rel (%p310) target = $region44
        $region43: #{tpu_custom_call.1} parent=39 // pred_region
          %v313 = vld [vmem:[%s293] sm:$0xff]
          %v314 = vpack.c.bf16 %v313, %v313
          %v315 = vld [vmem:[%s3] sm:$0xf]
          %v316 = vld [vmem:[%s3 + $0x4] sm:$0xf]
          %v317 = vld [vmem:[%s3 + $0x8] sm:$0xf]
          %v318 = vld [vmem:[%s3 + $0xc] sm:$0xf]
          %v319 = vld [vmem:[%s3 + $0x10] sm:$0xf]
          %v320 = vld [vmem:[%s3 + $0x14] sm:$0xf]
          %v321 = vld [vmem:[%s3 + $0x18] sm:$0xf]
          %v322 = vld [vmem:[%s3 + $0x1c] sm:$0xf]
          %v323 = vld [vmem:[%s3 + $0x20] sm:$0xf]
          %v324 = vld [vmem:[%s3 + $0x24] sm:$0xf]
          %v325 = vld [vmem:[%s3 + $0x28] sm:$0xf]
          %v326 = vld [vmem:[%s3 + $0x2c] sm:$0xf]
          %v327 = vld [vmem:[%s3 + $0x30] sm:$0xf]
          %v328 = vld [vmem:[%s3 + $0x34] sm:$0xf]
          %v329 = vld [vmem:[%s3 + $0x38] sm:$0xf]
          %v330 = vld [vmem:[%s3 + $0x3c] sm:$0xf]
          %v331 = vld [vmem:[%s4] sm:$0x1]
          %v333 = vlaneseq
          %v334 = vshrl.u32 %v333, 7
          %v335 = vsub.s32 0, %v334
          %v336 = vrot.slane %v331, %v335
          %v354 = vunpack.c.l.b16 %v315
          %v355 = vunpack.c.l.b16 %v316
          %v356 = vunpack.c.l.b16 %v317
          %v357 = vunpack.c.l.b16 %v318
          %v358 = vunpack.c.l.b16 %v319
          %v359 = vunpack.c.l.b16 %v320
          %v360 = vunpack.c.l.b16 %v321
          %v361 = vunpack.c.l.b16 %v322
          %v362 = vunpack.c.l.b16 %v323
          %v363 = vunpack.c.l.b16 %v324
          %v364 = vunpack.c.l.b16 %v325
          %v365 = vunpack.c.l.b16 %v326
          %v366 = vunpack.c.l.b16 %v327
          %v367 = vunpack.c.l.b16 %v328
          %v368 = vunpack.c.l.b16 %v329
          %v369 = vunpack.c.l.b16 %v330
          %v370 = vpack.c.b16 %v355, %v354
          %v371 = vpack.c.b16 %v357, %v356
          %v372 = vpack.c.b16 %v359, %v358
          %v373 = vpack.c.b16 %v361, %v360
          %v374 = vpack.c.b16 %v363, %v362
          %v375 = vpack.c.b16 %v365, %v364
          %v376 = vpack.c.b16 %v367, %v366
          %v377 = vpack.c.b16 %v369, %v368
          %vm378 = vcmask 261120
          %v380 = vsel %vm378, %v314, 0
          %v383 = vsel %vm378, %v370, 0
          %v386 = vsel %vm378, %v371, 0
          %v389 = vsel %vm378, %v372, 0
          %v392 = vsel %vm378, %v373, 0
          %v395 = vsel %vm378, %v374, 0
          %v398 = vsel %vm378, %v375, 0
          %v401 = vsel %vm378, %v376, 0
          %v404 = vsel %vm378, %v377, 0
          %406 = vmatprep.subr.bf16.mxu0 0
          %407 = vmatpush1.bf16.xpose.msra.mxu0 %v404
          %408 = vmatprep.subr.bf16.mxu0 0
          %409 = vmatpush1.bf16.xpose.msra.mxu0 %v401
          %410 = vmatprep.subr.bf16.mxu0 0
          %411 = vmatpush1.bf16.xpose.msra.mxu0 %v398
          %412 = vmatprep.subr.bf16.mxu0 0
          %413 = vmatpush1.bf16.xpose.msra.mxu0 %v395
          %414 = vmatprep.subr.bf16.mxu0 0
          %415 = vmatpush1.bf16.xpose.msra.mxu0 %v392
          %416 = vmatprep.subr.bf16.mxu0 0
          %417 = vmatpush1.bf16.xpose.msra.mxu0 %v389
          %418 = vmatprep.subr.bf16.mxu0 0
          %419 = vmatpush1.bf16.xpose.msra.mxu0 %v386
          %420 = vmatprep.subr.bf16.mxu0 0
          %421 = vmatpush1.bf16.xpose.msra.mxu0 %v383
          %422 = vmatprep.subr.bf16.mxu0 0
          %423 = vmatpush2.bf16.xpose.msra.mxu0 0
          %424 = vmatprep.subr.bf16.mxu0 0
          %425 = vmatpush2.bf16.xpose.msra.mxu0 0
          %426 = vmatprep.subr.bf16.mxu0 0
          %427 = vmatpush2.bf16.xpose.msra.mxu0 0
          %428 = vmatprep.subr.bf16.mxu0 0
          %429 = vmatpush2.bf16.xpose.msra.mxu0 0
          %430 = vmatprep.subr.bf16.mxu0 0
          %431 = vmatpush2.bf16.xpose.msra.mxu0 0
          %432 = vmatprep.subr.bf16.mxu0 0
          %433 = vmatpush2.bf16.xpose.msra.mxu0 0
          %434 = vmatprep.subr.bf16.mxu0 0
          %435 = vmatpush2.bf16.xpose.msra.mxu0 0
          %436 = vmatprep.subr.bf16.mxu0 0
          %437 = vmatpush2.bf16.xpose.msra.mxu0 0
          %438 = vmatprep.mubr.bf16.mxu0 0
          %439 = vmatmul.mubr.bf16.gmra.mxu0 %v380
          %v440 = vpop.f32.mrf.mxu0
          %v441 = vadd.f32 %v336, %v440
          %v442 = vpop.f32.mrf.mxu0
          %v443 = vpop.f32.mrf.mxu0
          %v444 = vpop.f32.mrf.mxu0
          %445 = vdwg.mxu0
          %v446 = vpack.c.bf16 %v441, %v441
          %447 = vst [vmem:[#allocation2] sm:$0xf] %v446
          %vm448 = vcmask 7168
          %449 = vst.msk [vmem:[#allocation3] sm:$0xff] %vm448, -inf
          %450 = vst.msk [vmem:[#allocation4] sm:$0xff] %vm448, 0.0
          %451 = vst [vmem:[#allocation5] sm:$0xff] 0.0
        $region44: #{tpu_custom_call.1} parent=39 // pred_fallthru
          _
        %v452 = vld [vmem:[%s300] sm:$0xf]
        %v453 = vld [vmem:[%s307] sm:$0xf]
        %v454 = vld [vmem:[#allocation2] sm:$0xf]
        %455 = vmatprep.subr.bf16.mxu0 0
        %456 = vmatpush1.bf16.xpose.msra.mxu0 0
        %457 = vmatprep.subr.bf16.mxu0 0
        %458 = vmatpush1.bf16.xpose.msra.mxu0 0
        %459 = vmatprep.subr.bf16.mxu0 0
        %460 = vmatpush1.bf16.xpose.msra.mxu0 0
        %461 = vmatprep.subr.bf16.mxu0 0
        %462 = vmatpush1.bf16.xpose.msra.mxu0 0
        %463 = vmatprep.subr.bf16.mxu0 0
        %464 = vmatpush1.bf16.xpose.msra.mxu0 0
        %465 = vmatprep.subr.bf16.mxu0 0
        %466 = vmatpush1.bf16.xpose.msra.mxu0 0
        %467 = vmatprep.subr.bf16.mxu0 0
        %468 = vmatpush1.bf16.xpose.msra.mxu0 0
        %469 = vmatprep.subr.bf16.mxu0 0
        %470 = vmatpush1.bf16.xpose.msra.mxu0 %v452
        %471 = vmatprep.subr.bf16.mxu0 0
        %472 = vmatpush2.bf16.xpose.msra.mxu0 0
        %473 = vmatprep.subr.bf16.mxu0 0
        %474 = vmatpush2.bf16.xpose.msra.mxu0 0
        %475 = vmatprep.subr.bf16.mxu0 0
        %476 = vmatpush2.bf16.xpose.msra.mxu0 0
        %477 = vmatprep.subr.bf16.mxu0 0
        %478 = vmatpush2.bf16.xpose.msra.mxu0 0
        %479 = vmatprep.subr.bf16.mxu0 0
        %480 = vmatpush2.bf16.xpose.msra.mxu0 0
        %481 = vmatprep.subr.bf16.mxu0 0
        %482 = vmatpush2.bf16.xpose.msra.mxu0 0
        %483 = vmatprep.subr.bf16.mxu0 0
        %484 = vmatpush2.bf16.xpose.msra.mxu0 0
        %485 = vmatprep.subr.bf16.mxu0 0
        %486 = vmatpush2.bf16.xpose.msra.mxu0 0
        %487 = vmatprep.mubr.bf16.mxu0 0
        %488 = vmatmul.mubr.bf16.gmra.mxu0 %v454
        %v489 = vpop.f32.mrf.mxu0
        %v490 = vadd.f32 0.0, %v489
        %v491 = vpop.f32.mrf.mxu0
        %v492 = vpop.f32.mrf.mxu0
        %v493 = vpop.f32.mrf.mxu0
        %494 = vdwg.mxu0
        %v495 = vld [vmem:[#allocation3] sm:$0xff]
        %vm496 = vcmask 64512
        %v497 = vsel %vm496, %v490, -inf
        %498 = vmax.xlane.f32.xlu0 %v497
        %v499 = vpop.xlane.xlu0 %498
        %v500 = vmax.f32 %v495, %v499
        %v501 = vsub.f32 %v495, %v500
        %v502 = vmul.f32 %v501, 1.442695
        %v503 = vpow.pop %v502
        %505 = vset.pattern.permute.xlu0 0
        %506 = vperm.xlu0 %505, %v500
        %v507 = vpop.permute.xlu0 %506
        %v509 = vsub.f32 %v490, %v507
        %v510 = vmul.f32 %v509, 1.442695
        %v511 = vpow.pop %v510
        %v512 = vld [vmem:[#allocation4] sm:$0xff]
        %v513 = vmul.f32 %v503, %v512
        %v514 = vsel %vm496, %v511, 0.0
        %515 = vadd.xlane.f32.xlu0 %v514
        %v516 = vpop.xlane.xlu0 %515
        %v517 = vadd.f32 %v513, %v516
        %vm518 = vcmask 7168
        %519 = vst.msk [vmem:[#allocation4] sm:$0xff] %vm518, %v517
        %v520 = vld [vmem:[#allocation5] sm:$0xff]
        %522 = vset.pattern.permute.xlu0 0
        %523 = vperm.xlu0 %522, %v503
        %v524 = vpop.permute.xlu0 %523
        %v526 = vmul.f32 %v524, %v520
        %v527 = vpack.c.bf16 %v511, %v511
        %v529 = vsel %vm496, %v527, 0
        %vm531 = vcmask 1043456
        %v533 = vsel %vm531, %v453, 0
        %535 = vmatprep.subr.bf16.mxu0 0
        %536 = vmatpush1.bf16.msra.mxu0 0
        %537 = vmatprep.subr.bf16.mxu0 0
        %538 = vmatpush1.bf16.msra.mxu0 0
        %539 = vmatprep.subr.bf16.mxu0 0
        %540 = vmatpush1.bf16.msra.mxu0 0
        %541 = vmatprep.subr.bf16.mxu0 0
        %542 = vmatpush1.bf16.msra.mxu0 0
        %543 = vmatprep.subr.bf16.mxu0 0
        %544 = vmatpush1.bf16.msra.mxu0 0
        %545 = vmatprep.subr.bf16.mxu0 0
        %546 = vmatpush1.bf16.msra.mxu0 0
        %547 = vmatprep.subr.bf16.mxu0 0
        %548 = vmatpush1.bf16.msra.mxu0 0
        %549 = vmatprep.subr.bf16.mxu0 0
        %550 = vmatpush1.bf16.msra.mxu0 %v533
        %551 = vmatprep.subr.bf16.mxu0 0
        %552 = vmatpush2.bf16.msra.mxu0 0
        %553 = vmatprep.subr.bf16.mxu0 0
        %554 = vmatpush2.bf16.msra.mxu0 0
        %555 = vmatprep.subr.bf16.mxu0 0
        %556 = vmatpush2.bf16.msra.mxu0 0
        %557 = vmatprep.subr.bf16.mxu0 0
        %558 = vmatpush2.bf16.msra.mxu0 0
        %559 = vmatprep.subr.bf16.mxu0 0
        %560 = vmatpush2.bf16.msra.mxu0 0
        %561 = vmatprep.subr.bf16.mxu0 0
        %562 = vmatpush2.bf16.msra.mxu0 0
        %563 = vmatprep.subr.bf16.mxu0 0
        %564 = vmatpush2.bf16.msra.mxu0 0
        %565 = vmatprep.subr.bf16.mxu0 0
        %566 = vmatpush2.bf16.msra.mxu0 0
        %567 = vmatprep.mubr.bf16.mxu0 0
        %568 = vmatmul.mubr.bf16.gmra.mxu0 %v529
        %v569 = vpop.f32.mrf.mxu0
        %v570 = vadd.f32 0.0, %v569
        %v571 = vpop.f32.mrf.mxu0
        %v572 = vpop.f32.mrf.mxu0
        %v573 = vpop.f32.mrf.mxu0
        %574 = vdwg.mxu0
        %v575 = vadd.f32 %v526, %v570
        %576 = vst [vmem:[#allocation5] sm:$0xff] %v575
        %577 = vst.msk [vmem:[#allocation3] sm:$0xff] %vm518, %v500
        // Predicated region
        $region45: #{tpu_custom_call.1} parent=39 // pred_check
          %p578 = pneg %p309
        $region46: #{tpu_custom_call.1} parent=39 // pred_check_branch
          %580 = sbr.rel (%p578) target = $region48
        $region47: #{tpu_custom_call.1} parent=39 // pred_region
          %v581 = vld [vmem:[#allocation4] sm:$0xff]
          %v582 = vrcp.pop %v581
          %v583 = vld [vmem:[#allocation5] sm:$0xff]
          %585 = vset.pattern.permute.xlu0 0
          %586 = vperm.xlu0 %585, %v582
          %v587 = vpop.permute.xlu0 %586
          %v589 = vmul.f32 %v583, %v587
          %590 = vst [vmem:[%s286] sm:$0xff] %v589
        $region48: #{tpu_custom_call.1} parent=39 // pred_fallthru
          _
        %s591 = sand.u32 %s174, 1
        %s592 = scalar_lea.sflag [#allocation7], %s591
        %s593 = sand.u32 %s174, 1
        %s594 = smul.addr %s593, 8
        %s595 = scalar_lea.vmem [#allocation6], %s594
        // Predicated region
        $region49: #{tpu_custom_call.1} parent=39 // pred_check
          %p596 = pneg %p184
        $region50: #{tpu_custom_call.1} parent=39 // pred_check_branch
          %598 = sbr.rel (%p596) target = $region52
        $region51: #{tpu_custom_call.1} parent=39 // pred_region
          %s600 = ssub.s32 128, 128
          %601 = vsyncadd %s592, %s600
          %s602 = sadd.s32 %s25, %s24
          %s603 = smul.addr %s602, 128
          %s604 = scalar_lea.hbm %s5, %s603
          %s606 = sshll.u32 %s595, 4
          %s607 = int_to_ptr.vmem [resolvable:$true] %s606
          %609 = dma.vmem_to_hbm [thread:$0]  %s607, 128, %s604, %s592
        $region52: #{tpu_custom_call.1} parent=39 // pred_fallthru
          _
      $region40: #{tpu_custom_call.1} parent=5 // pred_fallthru
        _
      %p610 = scmp.le.s32.totalorder 2, %s14
      // Predicated region
      $region53: #{tpu_custom_call.1} parent=5 // pred_check
        %p611 = pneg %p610
      $region54: #{tpu_custom_call.1} parent=5 // pred_check_branch
        %613 = sbr.rel (%p611) target = $region56
      $region55: #{tpu_custom_call.1} parent=5 // pred_region
        %s614 = ssub.s32 %s14, 2
        // Predicated region
        $region57: #{tpu_custom_call.1} parent=55 // pred_check
          %p615 = pneg %p190
        $region58: #{tpu_custom_call.1} parent=55 // pred_check_branch
          %617 = sbr.rel (%p615) target = $region60
        $region59: #{tpu_custom_call.1} parent=55 // pred_region
          %s618 = sand.u32 %s175, 1
          %s619 = scalar_lea.sflag [#allocation7], %s618
          %s620 = sand.u32 %s175, 1
          %s621 = smul.addr %s620, 8
          %s622 = scalar_lea.vmem [#allocation6], %s621
          %623 = dma.done %s619, 128
        $region60: #{tpu_custom_call.1} parent=55 // pred_fallthru
          _
      $region56: #{tpu_custom_call.1} parent=5 // pred_fallthru
        _
    $region6: #{tpu_custom_call.1} parent=1 // loop_footer
      %s18 = sadd.s32 1, %s14
    $region7: #{tpu_custom_call.1} parent=1 // loop_footer_branch
      %13 = sbr.rel target = $region3
    $region8: #{tpu_custom_call.1} parent=1 // loop_exit
      _
    %624 = vsyncpa [#allocation7], 1
    %s625 = scalar_lea.sflag [#allocation7], 1
    %626 = vsyncpa %s625, 1

</llo_original>
